<compile_context>
chip_gen: v7x
topology: tpu7x:2x2x1
jax: 0.10.0
libtpu: 0.0.40
codegen_flags: <defaults>
</compile_context>

<pallas_src>
import functools
import math

import jax
import jax.numpy as jnp
from jax.experimental import pallas as pl
from jax.experimental.pallas import tpu as pltpu

LN_EPS = 1e-12
_MiB = 1024 * 1024

# Slot heads in the order of DSTPretrainingHeads.forward (35 heads).
SLOT_NAMES = [
    "bus-leaveat", "train-arriveby", "bus-departure", "train-departure",
    "hotel-internet", "attraction-type", "taxi-leaveat", "hotel-parking",
    "train-bookpeople", "taxi-arriveby", "hotel-bookstay", "hotel-stars",
    "hospital-department", "hotel-bookday", "attraction-area", "hotel-type",
    "restaurant-area", "restaurant-booktime", "hotel-pricerange",
    "restaurant-food", "hotel-area", "restaurant-bookday", "hotel-bookpeople",
    "attraction-name", "train-destination", "restaurant-bookpeople",
    "bus-destination", "restaurant-name", "train-leaveat", "taxi-destination",
    "hotel-name", "restaurant-pricerange", "bus-day", "taxi-departure",
    "train-day",
]


def _round_up(x, m):
    return ((x + m - 1) // m) * m


def _gelu_exact(x):
    # PyTorch nn.GELU default / HF "gelu": exact erf-based GELU (done in f32).
    return x * 0.5 * (1.0 + jax.lax.erf(x * (1.0 / math.sqrt(2.0))))


def _vmem_capacity_bytes():
    """Best-effort query of per-core VMEM; conservative (v7x) fallback."""
    try:
        info = pltpu.get_tpu_info()
        cap = getattr(info, "vmem_capacity_bytes", None)
        if cap:
            return int(cap)
    except Exception:
        pass
    return 64 * _MiB


def _lm_vmem_bytes(tile_r, tile_v, hidden):
    """Double-buffered VMEM working set of the LM-head kernel (bytes)."""
    per_step = (tile_r * hidden * 4        # x tile (f32 activations)
                + hidden * hidden * 2      # wt (bf16)
                + 3 * hidden * 4           # bt / gamma / beta (f32)
                + hidden * tile_v * 2      # wd tile (bf16)
                + tile_v * 4               # bd tile (f32)
                + tile_r * tile_v * 2)     # logits tile (bf16)
    return 2 * per_step + tile_r * hidden * 2   # + single-buffered h scratch


def choose_lm_tiles(hidden_size, vocab_size):
    """Generation-aware (tile_r, tile_v, vmem_budget) for the LM head."""
    vmem_cap = _vmem_capacity_bytes()
    if vmem_cap >= 100 * _MiB:
        # v5e / v6e: 128 MiB physical VMEM.  tile_r >= H so wd is re-streamed
        # at most R/1024 times (~1.75x the output write at H=768).  v5e flips
        # to MXU-bound around tile_r ~ H, so 1024 is already past the knee.
        tile_r, tile_v = 1024, 4096
        vmem_budget = 100 * _MiB
    else:
        # v7x: 64 MiB per TensorCore -- smaller tiles, tighter budget.
        tile_r, tile_v = 512, 4096
        vmem_budget = max(32 * _MiB, min(vmem_cap - 8 * _MiB, 52 * _MiB))

    # Clamp the vocab tile to the (128-aligned) problem so tiny configs don't
    # over-pad; keeps lane-dense, unmasked stores.
    tile_v = min(tile_v, _round_up(vocab_size, 128))

    # Shrink until the double-buffered working set fits the budget.
    while (_lm_vmem_bytes(tile_r, tile_v, hidden_size) > int(0.9 * vmem_budget)
           and (tile_v > 512 or tile_r > 256)):
        if tile_v > 512:
            tile_v //= 2
        else:
            tile_r //= 2

    return tile_r, tile_v, vmem_budget


# ----------------------------- Pallas kernels -----------------------------

def lm_head_kernel(x_ref, wt_ref, bt_ref, gamma_ref, beta_ref, wd_ref, bd_ref,
                   out_ref, h_ref):
    """One (row_tile, vocab_tile) block of BertLMPredictionHead.

    Grid = (rows, vocab); rows outer ("parallel"), vocab inner ("arbitrary").
    The dense + GELU + LayerNorm transform depends only on the row tile, so it
    is computed once per row tile (at vocab index 0) and cached in the VMEM
    scratch h_ref; every vocab tile is then a single bf16 MXU matmul.
    NOTE: the vocab axis MUST stay the innermost, sequentially iterated
    ("arbitrary") axis or h_ref would be read uninitialized/stale.
    """
    j = pl.program_id(1)

    @pl.when(j == 0)
    def _():
        # transform.dense: bf16 operands (x cast on-chip), f32 accumulation.
        x = x_ref[...].astype(h_ref.dtype)
        h = jnp.dot(x, wt_ref[...],
                    preferred_element_type=jnp.float32) + bt_ref[...]
        h = _gelu_exact(h)
        # transform.LayerNorm over the hidden dim, statistics in f32.
        mean = jnp.mean(h, axis=-1, keepdims=True)
        var = jnp.mean((h - mean) * (h - mean), axis=-1, keepdims=True)
        h = (h - mean) * jax.lax.rsqrt(var + LN_EPS)
        h = h * gamma_ref[...] + beta_ref[...]
        h_ref[...] = h.astype(h_ref.dtype)

    # decoder matmul for this vocab tile (+ bias), f32 accumulate, bf16 store.
    logits = jnp.dot(h_ref[...], wd_ref[...],
                     preferred_element_type=jnp.float32) + bd_ref[...]
    out_ref[...] = logits.astype(out_ref.dtype)


def slot_heads_kernel(x_ref, w_ref, b_ref, out_ref):
    """All 35 slot heads fused as one (lane-padded) matmul on pooled_output.

    x:[Bp,H] w:[H,Np] b:[1,Np] -> out:[Bp,Np]  (GradReverse is identity fwd).
    """
    out = jnp.dot(x_ref[...], w_ref[...], preferred_element_type=jnp.float32)
    out_ref[...] = (out + b_ref[...]).astype(out_ref.dtype)


# ------------------------------ JAX wrappers -------------------------------

def lm_prediction_head(x_flat, wt, bt, gamma, beta, wd, bd, *,
                       vocab_size, tile_r, tile_v, vmem_budget,
                       crop_vocab=True, logits_dtype=jnp.bfloat16):
    """BertLMPredictionHead on a [R, H] f32 slab.

    wt/wd must already be bf16; wd/bd must already be padded to a multiple of
    tile_v (prepare_dst_params).  Returns [R, V] logits (or [R, v_pad] when
    crop_vocab=False; padded columns carry a large negative bias so they are
    inert under softmax).
    """
    R, H = x_flat.shape
    v_pad = wd.shape[1]
    assert v_pad % tile_v == 0, "wd must be pre-padded to a multiple of tile_v"

    # Clamp the row tile to the (8-aligned) problem.
    tile_r = min(tile_r, _round_up(R, 8))
    small_vmem = vmem_budget < 100 * _MiB
    if small_vmem and R >= 512:
        # v7x has 2 TensorCores: keep >= 2 row tiles so the "parallel" row
        # axis actually feeds both cores (never split the vocab axis instead).
        tile_r = min(tile_r, _round_up((R + 1) // 2, 8))
    r_pad = _round_up(R, tile_r)

    x = x_flat
    if r_pad != R:
        x = jnp.pad(x, ((0, r_pad - R), (0, 0)))

    grid = (r_pad // tile_r, v_pad // tile_v)
    n_row_tiles = grid[0]

    est = _lm_vmem_bytes(tile_r, tile_v, H)
    vmem_limit = int(min(vmem_budget, max(32 * _MiB, int(1.25 * est))))

    # Cost estimate that counts wd/bd/wt re-streaming once per row tile.
    cost = pl.CostEstimate(
        flops=2 * r_pad * H * H + 2 * r_pad * H * v_pad,
        transcendentals=r_pad * H,
        bytes_accessed=(r_pad * H * 4                              # x (f32)
                        + n_row_tiles * (H * H * 2 + 3 * H * 4)    # wt,bt,g,b
                        + n_row_tiles * (H * v_pad * 2 + v_pad * 4)  # wd,bd
                        + r_pad * v_pad * 2),                      # logits out
    )

    out = pl.pallas_call(
        lm_head_kernel,
        out_shape=jax.ShapeDtypeStruct((r_pad, v_pad), logits_dtype),
        grid_spec=pltpu.PrefetchScalarGridSpec(
            num_scalar_prefetch=0,
            grid=grid,
            in_specs=[
                pl.BlockSpec((tile_r, H), lambda i, j: (i, 0)),   # x (f32)
                pl.BlockSpec((H, H), lambda i, j: (0, 0)),        # wt (bf16)
                pl.BlockSpec((1, H), lambda i, j: (0, 0)),        # bt
                pl.BlockSpec((1, H), lambda i, j: (0, 0)),        # gamma
                pl.BlockSpec((1, H), lambda i, j: (0, 0)),        # beta
                pl.BlockSpec((H, tile_v), lambda i, j: (0, j)),   # wd (bf16)
                pl.BlockSpec((1, tile_v), lambda i, j: (0, j)),   # bd
            ],
            out_specs=pl.BlockSpec((tile_r, tile_v), lambda i, j: (i, j)),
            scratch_shapes=[pltpu.VMEM((tile_r, H), jnp.bfloat16)],
        ),
        compiler_params=pltpu.CompilerParams(
            dimension_semantics=("parallel", "arbitrary"),
            vmem_limit_bytes=vmem_limit,
        ),
        cost_estimate=cost,
    )(x, wt, bt, gamma, beta, wd, bd)

    if r_pad != R:
        out = out[:R]
    if crop_vocab and v_pad != vocab_size:
        out = out[:, :vocab_size]
    return out


def slot_heads_fused(pooled, w_slots, b_slots):
    """All 35 slot heads as one lane-padded matmul -> [B, sum(n_i)] f32."""
    B, H = pooled.shape
    n_total = w_slots.shape[1]
    b_pad = _round_up(B, 8)          # full sublanes
    n_pad = _round_up(n_total, 128)  # full lanes -> unmasked stores

    x = jnp.pad(pooled, ((0, b_pad - B), (0, 0))) if b_pad != B else pooled
    w = (jnp.pad(w_slots, ((0, 0), (0, n_pad - n_total)))
         if n_pad != n_total else w_slots)
    b = (jnp.pad(b_slots, ((0, 0), (0, n_pad - n_total)))
         if n_pad != n_total else b_slots)

    out = pl.pallas_call(
        slot_heads_kernel,
        out_shape=jax.ShapeDtypeStruct((b_pad, n_pad), jnp.float32),
        grid=(1,),
        in_specs=[
            pl.BlockSpec((b_pad, H), lambda i: (0, 0)),
            pl.BlockSpec((H, n_pad), lambda i: (0, 0)),
            pl.BlockSpec((1, n_pad), lambda i: (0, 0)),
        ],
        out_specs=pl.BlockSpec((b_pad, n_pad), lambda i: (0, 0)),
    )(x, w, b)
    return out[:B, :n_total]


# ------------------------- parameter preparation ---------------------------

def init_params(key, hidden_size, vocab_size, slot_sizes):
    keys = jax.random.split(key, 8 + 2 * len(slot_sizes))
    scale = 0.02
    params = {
        "wt": scale * jax.random.normal(keys[0], (hidden_size, hidden_size), jnp.float32),
        "bt": scale * jax.random.normal(keys[1], (1, hidden_size), jnp.float32),
        "gamma": jnp.ones((1, hidden_size), jnp.float32),
        "beta": jnp.zeros((1, hidden_size), jnp.float32),
        "wd": scale * jax.random.normal(keys[2], (hidden_size, vocab_size), jnp.float32),
        "bd": scale * jax.random.normal(keys[3], (1, vocab_size), jnp.float32),
    }
    slot_ws, slot_bs = [], []
    for i, n in enumerate(slot_sizes):
        slot_ws.append(scale * jax.random.normal(keys[8 + 2 * i], (hidden_size, n), jnp.float32))
        slot_bs.append(scale * jax.random.normal(keys[8 + 2 * i + 1], (1, n), jnp.float32))
    # Fuse all slot-head linears into a single [H, sum(n_i)] matmul.
    params["w_slots"] = jnp.concatenate(slot_ws, axis=1)
    params["b_slots"] = jnp.concatenate(slot_bs, axis=1)
    return params


def prepare_dst_params(params, *, tile_v, vocab_pad_bias=-1e9):
    """One-time, outside-jit weight prep: bf16 cast + vocab padding.

    Padded bd columns get a large negative bias so that, if crop_vocab=False,
    the padded vocab logits are inert under softmax/cross-entropy.
    """
    H, V = params["wd"].shape
    v_pad = _round_up(V, tile_v)
    wd = params["wd"].astype(jnp.bfloat16)
    bd = params["bd"].astype(jnp.float32)
    if v_pad != V:
        wd = jnp.pad(wd, ((0, 0), (0, v_pad - V)))
        bd = jnp.pad(bd, ((0, 0), (0, v_pad - V)), constant_values=vocab_pad_bias)
    return {
        "wt": params["wt"].astype(jnp.bfloat16),
        "bt": params["bt"].astype(jnp.float32),
        "gamma": params["gamma"].astype(jnp.float32),
        "beta": params["beta"].astype(jnp.float32),
        "wd": wd,
        "bd": bd,
        "w_slots": params["w_slots"].astype(jnp.float32),
        "b_slots": params["b_slots"].astype(jnp.float32),
    }


# ------------------------------ forward pass -------------------------------

@functools.partial(
    jax.jit,
    static_argnames=("slot_sizes", "vocab_size", "tile_r", "tile_v",
                     "vmem_budget", "crop_vocab"))
def dst_pretraining_heads_forward(sequence_output, pooled_output, prepared,
                                  *, slot_sizes, vocab_size, tile_r, tile_v,
                                  vmem_budget, crop_vocab=True):
    B, S, H = sequence_output.shape

    lm_flat = lm_prediction_head(
        sequence_output.reshape(B * S, H),
        prepared["wt"], prepared["bt"], prepared["gamma"], prepared["beta"],
        prepared["wd"], prepared["bd"],
        vocab_size=vocab_size, tile_r=tile_r, tile_v=tile_v,
        vmem_budget=vmem_budget, crop_vocab=crop_vocab)
    v_out = vocab_size if crop_vocab else prepared["wd"].shape[1]
    lm_prediction_scores = lm_flat.reshape(B, S, v_out)

    slots_all = slot_heads_fused(pooled_output, prepared["w_slots"],
                                 prepared["b_slots"])
    # The module's forward returns 35 separate per-slot score tensors; the
    # slices here are cheap views of the fused matmul output.
    slot_outputs = []
    off = 0
    for n in slot_sizes:
        slot_outputs.append(slots_all[:, off:off + n])
        off += n

    return (lm_prediction_scores,) + tuple(slot_outputs)


# ------------------------------- Reference --------------------------------

def _reference_forward(sequence_output, pooled_output, params, slot_sizes,
                       matmul_dtype=jnp.float32, logits_dtype=jnp.float32):
    """Pure-JAX reference; optionally mimics the kernel's bf16 numerics."""
    x = sequence_output.astype(matmul_dtype)
    wt = params["wt"].astype(matmul_dtype)
    wd = params["wd"].astype(matmul_dtype)

    h = jnp.dot(x, wt, preferred_element_type=jnp.float32) + params["bt"][0]
    h = _gelu_exact(h)
    mean = jnp.mean(h, axis=-1, keepdims=True)
    var = jnp.mean((h - mean) ** 2, axis=-1, keepdims=True)
    h = (h - mean) * jax.lax.rsqrt(var + LN_EPS)
    h = (h * params["gamma"][0] + params["beta"][0]).astype(matmul_dtype)
    lm = jnp.dot(h, wd, preferred_element_type=jnp.float32) + params["bd"][0]
    lm = lm.astype(logits_dtype).astype(jnp.float32)

    slots_all = pooled_output @ params["w_slots"] + params["b_slots"][0]
    outs, off = [], 0
    for n in slot_sizes:
        outs.append(slots_all[:, off:off + n])
        off += n
    return (lm,) + tuple(outs)


if __name__ == "__main__":
    # Small synthetic config (config.hidden_size=32, vocab=64) and
    # lang.n_state_values with deterministic small cardinalities (35 heads).
    B, S, H, V = 2, 8, 32, 64
    slot_sizes = tuple(3 + (i % 9) for i in range(len(SLOT_NAMES)))

    key = jax.random.PRNGKey(0)
    k_seq, k_pool, k_params = jax.random.split(key, 3)

    sequence_output = jax.random.normal(k_seq, (B, S, H), jnp.float32)
    pooled_output = jax.random.normal(k_pool, (B, H), jnp.float32)
    params = init_params(k_params, H, V, slot_sizes)

    # Generation-aware tiling + one-time weight prep (OUTSIDE the jitted step).
    tile_r, tile_v, vmem_budget = choose_lm_tiles(H, V)
    prepared = prepare_dst_params(params, tile_v=tile_v)

    outs = dst_pretraining_heads_forward(
        sequence_output, pooled_output, prepared,
        slot_sizes=slot_sizes, vocab_size=V,
        tile_r=tile_r, tile_v=tile_v, vmem_budget=vmem_budget,
        crop_vocab=True)
    outs = jax.block_until_ready(outs)

    # Sanity checks: vs a reference that matches the kernel's bf16 numerics
    # (tight-ish) and vs the pure-f32 PyTorch-equivalent reference (loose,
    # bf16 rounding level).
    refs_matched = _reference_forward(sequence_output, pooled_output, params,
                                      slot_sizes, matmul_dtype=jnp.bfloat16,
                                      logits_dtype=jnp.bfloat16)
    refs_f32 = _reference_forward(sequence_output, pooled_output, params,
                                  slot_sizes)

    assert len(outs) == 1 + len(SLOT_NAMES)
    assert outs[0].shape == (B, S, V)
    lm = outs[0].astype(jnp.float32)
    assert float(jnp.max(jnp.abs(lm - refs_matched[0]))) < 1e-2, "lm mismatch (matched ref)"
    assert float(jnp.max(jnp.abs(lm - refs_f32[0]))) < 5e-2, "lm mismatch (f32 ref)"
    for i, (o, r) in enumerate(zip(outs[1:], refs_f32[1:]), start=1):
        assert o.shape == r.shape, (i, o.shape, r.shape)
        assert float(jnp.max(jnp.abs(o - r))) < 5e-3, f"mismatch on output {i}"

    print("KERNEL_OK")
</pallas_src>

<mosaic_0001>
module attributes {stable_mosaic.version = 11 : i64} {
  func.func @slot_heads_kernel(%arg0: i32, %arg1: memref<8x32xf32, #tpu.memory_space<vmem>>, %arg2: memref<32x256xf32, #tpu.memory_space<vmem>>, %arg3: memref<1x256xf32, #tpu.memory_space<vmem>>, %arg4: memref<8x256xf32, #tpu.memory_space<vmem>>) attributes {dimension_semantics = [#tpu.dimension_semantics<arbitrary>], iteration_bounds = array<i64: 1>, scalar_prefetch = 0 : i64, scratch_operands = 0 : i64, tpu.core_type = #tpu.core_type<tc>, window_params = [{pipeline_mode = #tpu.pipeline_mode<synchronous>, transform_indices = @transform_0, window_bounds = array<i64: 8, 32>}, {pipeline_mode = #tpu.pipeline_mode<synchronous>, transform_indices = @transform_1, window_bounds = array<i64: 32, 256>}, {pipeline_mode = #tpu.pipeline_mode<synchronous>, transform_indices = @transform_2, window_bounds = array<i64: 1, 256>}, {pipeline_mode = #tpu.pipeline_mode<synchronous>, transform_indices = @transform_3, window_bounds = array<i64: 8, 256>}]} {
    %c0 = arith.constant 0 : index
    %c0_0 = arith.constant 0 : index
    %0 = vector.load %arg1[%c0, %c0_0] : memref<8x32xf32, #tpu.memory_space<vmem>>, vector<8x32xf32>
    %c0_1 = arith.constant 0 : index
    %c0_2 = arith.constant 0 : index
    %1 = vector.load %arg2[%c0_1, %c0_2] : memref<32x256xf32, #tpu.memory_space<vmem>>, vector<32x256xf32>
    %cst = arith.constant dense<0.000000e+00> : vector<8x256xf32>
    %2 = tpu.matmul %0, %1, %cst {dimension_numbers = #tpu.dot_dimension_numbers<[1], [0], [0], [1], [0, 0, 1, 1], [], []>} : vector<8x32xf32>, vector<32x256xf32>, vector<8x256xf32> -> vector<8x256xf32>
    %c0_3 = arith.constant 0 : index
    %c0_4 = arith.constant 0 : index
    %3 = vector.load %arg3[%c0_3, %c0_4] : memref<1x256xf32, #tpu.memory_space<vmem>>, vector<1x256xf32>
    %4 = vector.broadcast %3 : vector<1x256xf32> to vector<8x256xf32>
    %5 = arith.addf %2, %4 : vector<8x256xf32>
    %c0_5 = arith.constant 0 : index
    %c0_6 = arith.constant 0 : index
    %6 = vector.load %arg4[%c0_5, %c0_6] : memref<8x256xf32, #tpu.memory_space<vmem>>, vector<8x256xf32>
    tpu.vector_store %arg4[%c0_5, %c0_6], %5 {strides = array<i32>} : memref<8x256xf32, #tpu.memory_space<vmem>>, vector<8x256xf32>,
    return
  }
  func.func @transform_0(%arg0: i32) -> (i32, i32) {
    %c0_i32 = arith.constant 0 : i32
    %c0_i32_0 = arith.constant 0 : i32
    %c0_i32_1 = arith.constant 0 : i32
    return %c0_i32, %c0_i32_0 : i32, i32
  }
  func.func @transform_1(%arg0: i32) -> (i32, i32) {
    %c0_i32 = arith.constant 0 : i32
    %c0_i32_0 = arith.constant 0 : i32
    %c0_i32_1 = arith.constant 0 : i32
    return %c0_i32, %c0_i32_0 : i32, i32
  }
  func.func @transform_2(%arg0: i32) -> (i32, i32) {
    %c0_i32 = arith.constant 0 : i32
    %c0_i32_0 = arith.constant 0 : i32
    %c0_i32_1 = arith.constant 0 : i32
    return %c0_i32, %c0_i32_0 : i32, i32
  }
  func.func @transform_3(%arg0: i32) -> (i32, i32) {
    %c0_i32 = arith.constant 0 : i32
    %c0_i32_0 = arith.constant 0 : i32
    %c0_i32_1 = arith.constant 0 : i32
    return %c0_i32, %c0_i32_0 : i32, i32
  }
}

module attributes {stable_mosaic.version = 11 : i64} {
  func.func @lm_head_kernel(%arg0: i32, %arg1: i32, %arg2: memref<16x32xf32, #tpu.memory_space<vmem>>, %arg3: memref<32x32xbf16, #tpu.memory_space<vmem>>, %arg4: memref<1x32xf32, #tpu.memory_space<vmem>>, %arg5: memref<1x32xf32, #tpu.memory_space<vmem>>, %arg6: memref<1x32xf32, #tpu.memory_space<vmem>>, %arg7: memref<32x128xbf16, #tpu.memory_space<vmem>>, %arg8: memref<1x128xf32, #tpu.memory_space<vmem>>, %arg9: memref<16x128xbf16, #tpu.memory_space<vmem>>, %arg10: memref<16x32xbf16, #tpu.memory_space<vmem>>) attributes {dimension_semantics = [#tpu.dimension_semantics<parallel>, #tpu.dimension_semantics<arbitrary>], iteration_bounds = array<i64: 1, 1>, scalar_prefetch = 0 : i64, scratch_operands = 1 : i64, tpu.core_type = #tpu.core_type<tc>, window_params = [{transform_indices = @transform_0, window_bounds = array<i64: 16, 32>}, {pipeline_mode = #tpu.pipeline_mode<synchronous>, transform_indices = @transform_1, window_bounds = array<i64: 32, 32>}, {pipeline_mode = #tpu.pipeline_mode<synchronous>, transform_indices = @transform_2, window_bounds = array<i64: 1, 32>}, {pipeline_mode = #tpu.pipeline_mode<synchronous>, transform_indices = @transform_3, window_bounds = array<i64: 1, 32>}, {pipeline_mode = #tpu.pipeline_mode<synchronous>, transform_indices = @transform_4, window_bounds = array<i64: 1, 32>}, {transform_indices = @transform_5, window_bounds = array<i64: 32, 128>}, {transform_indices = @transform_6, window_bounds = array<i64: 1, 128>}, {transform_indices = @transform_7, window_bounds = array<i64: 16, 128>}]} {
    %c0_i32 = arith.constant 0 : i32
    %0 = arith.cmpi eq, %arg1, %c0_i32 : i32
    %1 = arith.extui %0 : i1 to i32
    %c0_i32_0 = arith.constant 0 : i32
    %2 = arith.cmpi ne, %1, %c0_i32_0 : i32
    scf.if %2 {
      %c0_8 = arith.constant 0 : index
      %c0_9 = arith.constant 0 : index
      %11 = vector.load %arg2[%c0_8, %c0_9] : memref<16x32xf32, #tpu.memory_space<vmem>>, vector<16x32xf32>
      %12 = arith.truncf %11 : vector<16x32xf32> to vector<16x32xbf16>
      %c0_10 = arith.constant 0 : index
      %c0_11 = arith.constant 0 : index
      %13 = vector.load %arg3[%c0_10, %c0_11] : memref<32x32xbf16, #tpu.memory_space<vmem>>, vector<32x32xbf16>
      %cst_12 = arith.constant dense<0.000000e+00> : vector<16x32xf32>
      %14 = tpu.matmul %12, %13, %cst_12 {dimension_numbers = #tpu.dot_dimension_numbers<[1], [0], [0], [1], [0, 0, 1, 1], [], []>} : vector<16x32xbf16>, vector<32x32xbf16>, vector<16x32xf32> -> vector<16x32xf32>
      %c0_13 = arith.constant 0 : index
      %c0_14 = arith.constant 0 : index
      %15 = vector.load %arg4[%c0_13, %c0_14] : memref<1x32xf32, #tpu.memory_space<vmem>>, vector<1x32xf32>
      %16 = vector.broadcast %15 : vector<1x32xf32> to vector<16x32xf32>
      %17 = arith.addf %14, %16 : vector<16x32xf32>
      %cst_15 = arith.constant 5.000000e-01 : f32
      %18 = vector.broadcast %cst_15 : f32 to vector<16x32xf32>
      %19 = arith.mulf %17, %18 : vector<16x32xf32>
      %cst_16 = arith.constant 0.707106769 : f32
      %20 = vector.broadcast %cst_16 : f32 to vector<16x32xf32>
      %21 = arith.mulf %17, %20 : vector<16x32xf32>
      %22 = math.erf %21 : vector<16x32xf32>
      %cst_17 = arith.constant 1.000000e+00 : f32
      %23 = vector.broadcast %cst_17 : f32 to vector<16x32xf32>
      %24 = arith.addf %23, %22 : vector<16x32xf32>
      %25 = arith.mulf %19, %24 : vector<16x32xf32>
      %cst_18 = arith.constant dense<0.000000e+00> : vector<16xf32>
      %26 = vector.multi_reduction <add>, %25, %cst_18 [1] : vector<16x32xf32> to vector<16xf32>
      %27 = vector.shape_cast %26 : vector<16xf32> to vector<16x1xf32>
      %cst_19 = arith.constant 3.200000e+01 : f32
      %28 = vector.broadcast %cst_19 : f32 to vector<16x1xf32>
      %29 = arith.divf %27, %28 : vector<16x1xf32>
      %30 = vector.broadcast %29 : vector<16x1xf32> to vector<16x32xf32>
      %31 = arith.subf %25, %30 : vector<16x32xf32>
      %32 = vector.broadcast %29 : vector<16x1xf32> to vector<16x32xf32>
      %33 = arith.subf %25, %32 : vector<16x32xf32>
      %34 = arith.mulf %31, %33 : vector<16x32xf32>
      %cst_20 = arith.constant dense<0.000000e+00> : vector<16xf32>
      %35 = vector.multi_reduction <add>, %34, %cst_20 [1] : vector<16x32xf32> to vector<16xf32>
      %36 = vector.shape_cast %35 : vector<16xf32> to vector<16x1xf32>
      %cst_21 = arith.constant 3.200000e+01 : f32
      %37 = vector.broadcast %cst_21 : f32 to vector<16x1xf32>
      %38 = arith.divf %36, %37 : vector<16x1xf32>
      %39 = vector.broadcast %29 : vector<16x1xf32> to vector<16x32xf32>
      %40 = arith.subf %25, %39 : vector<16x32xf32>
      %cst_22 = arith.constant 9.99999996E-13 : f32
      %41 = vector.broadcast %cst_22 : f32 to vector<16x1xf32>
      %42 = arith.addf %38, %41 : vector<16x1xf32>
      %43 = math.rsqrt %42 : vector<16x1xf32>
      %44 = vector.broadcast %43 : vector<16x1xf32> to vector<16x32xf32>
      %45 = arith.mulf %40, %44 : vector<16x32xf32>
      %c0_23 = arith.constant 0 : index
      %c0_24 = arith.constant 0 : index
      %46 = vector.load %arg5[%c0_23, %c0_24] : memref<1x32xf32, #tpu.memory_space<vmem>>, vector<1x32xf32>
      %47 = vector.broadcast %46 : vector<1x32xf32> to vector<16x32xf32>
      %48 = arith.mulf %45, %47 : vector<16x32xf32>
      %c0_25 = arith.constant 0 : index
      %c0_26 = arith.constant 0 : index
      %49 = vector.load %arg6[%c0_25, %c0_26] : memref<1x32xf32, #tpu.memory_space<vmem>>, vector<1x32xf32>
      %50 = vector.broadcast %49 : vector<1x32xf32> to vector<16x32xf32>
      %51 = arith.addf %48, %50 : vector<16x32xf32>
      %52 = arith.truncf %51 : vector<16x32xf32> to vector<16x32xbf16>
      %c0_27 = arith.constant 0 : index
      %c0_28 = arith.constant 0 : index
      %53 = vector.load %arg10[%c0_27, %c0_28] : memref<16x32xbf16, #tpu.memory_space<vmem>>, vector<16x32xbf16>
      tpu.vector_store %arg10[%c0_27, %c0_28], %52 {strides = array<i32>} : memref<16x32xbf16, #tpu.memory_space<vmem>>, vector<16x32xbf16>,
    } else {
    }
    %c0 = arith.constant 0 : index
    %c0_1 = arith.constant 0 : index
    %3 = vector.load %arg10[%c0, %c0_1] : memref<16x32xbf16, #tpu.memory_space<vmem>>, vector<16x32xbf16>
    %c0_2 = arith.constant 0 : index
    %c0_3 = arith.constant 0 : index
    %4 = vector.load %arg7[%c0_2, %c0_3] : memref<32x128xbf16, #tpu.memory_space<vmem>>, vector<32x128xbf16>
    %cst = arith.constant dense<0.000000e+00> : vector<16x128xf32>
    %5 = tpu.matmul %3, %4, %cst {dimension_numbers = #tpu.dot_dimension_numbers<[1], [0], [0], [1], [0, 0, 1, 1], [], []>} : vector<16x32xbf16>, vector<32x128xbf16>, vector<16x128xf32> -> vector<16x128xf32>
    %c0_4 = arith.constant 0 : index
    %c0_5 = arith.constant 0 : index
    %6 = vector.load %arg8[%c0_4, %c0_5] : memref<1x128xf32, #tpu.memory_space<vmem>>, vector<1x128xf32>
    %7 = vector.broadcast %6 : vector<1x128xf32> to vector<16x128xf32>
    %8 = arith.addf %5, %7 : vector<16x128xf32>
    %9 = arith.truncf %8 : vector<16x128xf32> to vector<16x128xbf16>
    %c0_6 = arith.constant 0 : index
    %c0_7 = arith.constant 0 : index
    %10 = vector.load %arg9[%c0_6, %c0_7] : memref<16x128xbf16, #tpu.memory_space<vmem>>, vector<16x128xbf16>
    tpu.vector_store %arg9[%c0_6, %c0_7], %9 {strides = array<i32>} : memref<16x128xbf16, #tpu.memory_space<vmem>>, vector<16x128xbf16>,
    return
  }
  func.func @transform_0(%arg0: i32, %arg1: i32) -> (i32, i32) {
    %c0_i32 = arith.constant 0 : i32
    %c0_i32_0 = arith.constant 0 : i32
    return %arg0, %c0_i32 : i32, i32
  }
  func.func @transform_1(%arg0: i32, %arg1: i32) -> (i32, i32) {
    %c0_i32 = arith.constant 0 : i32
    %c0_i32_0 = arith.constant 0 : i32
    %c0_i32_1 = arith.constant 0 : i32
    return %c0_i32, %c0_i32_0 : i32, i32
  }
  func.func @transform_2(%arg0: i32, %arg1: i32) -> (i32, i32) {
    %c0_i32 = arith.constant 0 : i32
    %c0_i32_0 = arith.constant 0 : i32
    %c0_i32_1 = arith.constant 0 : i32
    return %c0_i32, %c0_i32_0 : i32, i32
  }
  func.func @transform_3(%arg0: i32, %arg1: i32) -> (i32, i32) {
    %c0_i32 = arith.constant 0 : i32
    %c0_i32_0 = arith.constant 0 : i32
    %c0_i32_1 = arith.constant 0 : i32
    return %c0_i32, %c0_i32_0 : i32, i32
  }
  func.func @transform_4(%arg0: i32, %arg1: i32) -> (i32, i32) {
    %c0_i32 = arith.constant 0 : i32
    %c0_i32_0 = arith.constant 0 : i32
    %c0_i32_1 = arith.constant 0 : i32
    return %c0_i32, %c0_i32_0 : i32, i32
  }
  func.func @transform_5(%arg0: i32, %arg1: i32) -> (i32, i32) {
    %c0_i32 = arith.constant 0 : i32
    %c0_i32_0 = arith.constant 0 : i32
    return %c0_i32, %arg1 : i32, i32
  }
  func.func @transform_6(%arg0: i32, %arg1: i32) -> (i32, i32) {
    %c0_i32 = arith.constant 0 : i32
    %c0_i32_0 = arith.constant 0 : i32
    return %c0_i32, %arg1 : i32, i32
  }
  func.func @transform_7(%arg0: i32, %arg1: i32) -> (i32, i32) {
    %c0_i32 = arith.constant 0 : i32
    return %arg0, %arg1 : i32, i32
  }
}

</mosaic_0001>

<llo_original>
// kernel: dst_pretraining_heads_forward.3
$region0: #{dst_pretraining_heads_forward.3}
  #allocation0 [shape = 'u32[]', space=smem, size = 0x4, offset = 0x4, fixed_abs, tag = 'smem constant byte address 0x4 - core index']
  #allocation1 [shape = 'u32[144,128]{1,0:T(1,128)}', space=vmem, size = 0x12000, scoped, tag = 'internal scratch']
  %s0 = inlined_call_operand.vmem [shape: f32[8,32], index: 0, kind: input, shape index: {}]
  %s1 = inlined_call_operand.vmem [shape: f32[32,256], index: 1, kind: input, shape index: {}]
  %s2 = inlined_call_operand.vmem [shape: f32[1,256], index: 2, kind: input, shape index: {}]
  %s3 = inlined_call_operand.vmem [shape: f32[8,256], index: 3, kind: output, shape index: {}]
  %s4 = sld [smem:[#allocation0]]
  $region22: #{dst_pretraining_heads_forward.3} parent=0
    _
  %s6 = ssub.s32 1, %s4
  %s7 = scalar_select 0, %s6, %s4
  // Predicated region
  $region2: #{dst_pretraining_heads_forward.3} parent=0 // pred_check
    _
  $region3: #{dst_pretraining_heads_forward.3} parent=0 // pred_check_branch
    %9 = sbr.rel (0) target = $region5
  $region4: #{dst_pretraining_heads_forward.3} parent=0 // pred_region
    _
  $region5: #{dst_pretraining_heads_forward.3} parent=0 // pred_fallthru
    _
  // Predicated region
  $region6: #{dst_pretraining_heads_forward.3} parent=0 // pred_check
    _
  $region7: #{dst_pretraining_heads_forward.3} parent=0 // pred_check_branch
    %11 = sbr.rel (0) target = $region9
  $region8: #{dst_pretraining_heads_forward.3} parent=0 // pred_region
    _
  $region9: #{dst_pretraining_heads_forward.3} parent=0 // pred_fallthru
    _
  // Predicated region
  $region10: #{dst_pretraining_heads_forward.3} parent=0 // pred_check
    _
  $region11: #{dst_pretraining_heads_forward.3} parent=0 // pred_check_branch
    %13 = sbr.rel (0) target = $region13
  $region12: #{dst_pretraining_heads_forward.3} parent=0 // pred_region
    _
  $region13: #{dst_pretraining_heads_forward.3} parent=0 // pred_fallthru
    _
  %v14 = vld [vmem:[%s0] sm:$0xff]
  %v15 = vld [vmem:[%s1] sm:$0xff]
  %v16 = vld [vmem:[%s1 + $0x8] sm:$0xff]
  %v17 = vld [vmem:[%s1 + $0x10] sm:$0xff]
  %v18 = vld [vmem:[%s1 + $0x18] sm:$0xff]
  %v19 = vld [vmem:[%s1 + $0x20] sm:$0xff]
  %v20 = vld [vmem:[%s1 + $0x28] sm:$0xff]
  %v21 = vld [vmem:[%s1 + $0x30] sm:$0xff]
  %v22 = vld [vmem:[%s1 + $0x38] sm:$0xff]
  %v23 = vld [vmem:[%s2] sm:$0x3]
  %v25 = vlaneseq
  %v26 = vshrl.u32 %v25, 7
  %v27 = vsub.s32 0, %v26
  %v28 = vrot.slane %v23, %v27
  %v29 = vlaneseq
  %v30 = vshrl.u32 %v29, 7
  %v31 = vsub.s32 1, %v30
  %v32 = vrot.slane %v23, %v31
  %vm35 = vcmask 261120
  %v37 = vsel %vm35, %v14, 0
  %39 = vmatprep.subr.mxu0 %v16
  %40 = vmatpush1.msra.mxu0 %v15
  %41 = vmatprep.subr.mxu0 %v18
  %42 = vmatpush1.msra.mxu0 %v17
  %43 = vmatprep.subr.mxu0 %v20
  %44 = vmatpush1.msra.mxu0 %v19
  %45 = vmatprep.subr.mxu0 %v22
  %46 = vmatpush1.msra.mxu0 %v21
  %47 = vmatprep.subr.mxu0 0.0
  %48 = vmatpush1.msra.mxu0 0.0
  %49 = vmatprep.subr.mxu0 0.0
  %50 = vmatpush1.msra.mxu0 0.0
  %51 = vmatprep.subr.mxu0 0.0
  %52 = vmatpush1.msra.mxu0 0.0
  %53 = vmatprep.subr.mxu0 0.0
  %54 = vmatpush1.msra.mxu0 0.0
  %55 = vmatprep.subr.mxu0 0.0
  %56 = vmatpush1.msra.mxu0 0.0
  %57 = vmatprep.subr.mxu0 0.0
  %58 = vmatpush1.msra.mxu0 0.0
  %59 = vmatprep.subr.mxu0 0.0
  %60 = vmatpush1.msra.mxu0 0.0
  %61 = vmatprep.subr.mxu0 0.0
  %62 = vmatpush1.msra.mxu0 0.0
  %63 = vmatprep.subr.mxu0 0.0
  %64 = vmatpush1.msra.mxu0 0.0
  %65 = vmatprep.subr.mxu0 0.0
  %66 = vmatpush1.msra.mxu0 0.0
  %67 = vmatprep.subr.mxu0 0.0
  %68 = vmatpush1.msra.mxu0 0.0
  %69 = vmatprep.subr.mxu0 0.0
  %70 = vmatpush1.msra.mxu0 0.0
  %71 = vmatprep.subr.mxu0 0.0
  %72 = vmatpush1.msra.mxu0 0.0
  %73 = vmatprep.subr.mxu0 0.0
  %74 = vmatpush1.msra.mxu0 0.0
  %75 = vmatprep.subr.mxu0 0.0
  %76 = vmatpush1.msra.mxu0 0.0
  %77 = vmatprep.subr.mxu0 0.0
  %78 = vmatpush1.msra.mxu0 0.0
  %79 = vmatprep.subr.mxu0 0.0
  %80 = vmatpush1.msra.mxu0 0.0
  %81 = vmatprep.subr.mxu0 0.0
  %82 = vmatpush1.msra.mxu0 0.0
  %83 = vmatprep.subr.mxu0 0.0
  %84 = vmatpush1.msra.mxu0 0.0
  %85 = vmatprep.subr.mxu0 0.0
  %86 = vmatpush1.msra.mxu0 0.0
  %87 = vmatprep.subr.mxu0 0.0
  %88 = vmatpush1.msra.mxu0 0.0
  %89 = vmatprep.subr.mxu0 0.0
  %90 = vmatpush1.msra.mxu0 0.0
  %91 = vmatprep.subr.mxu0 0.0
  %92 = vmatpush1.msra.mxu0 0.0
  %93 = vmatprep.subr.mxu0 0.0
  %94 = vmatpush1.msra.mxu0 0.0
  %95 = vmatprep.subr.mxu0 0.0
  %96 = vmatpush1.msra.mxu0 0.0
  %97 = vmatprep.subr.mxu0 0.0
  %98 = vmatpush1.msra.mxu0 0.0
  %99 = vmatprep.subr.mxu0 0.0
  %100 = vmatpush1.msra.mxu0 0.0
  %101 = vmatprep.subr.mxu0 0.0
  %102 = vmatpush1.msra.mxu0 0.0
  %103 = vmatprep.mubr.f32.mxu0 0.0
  %104 = vmatmul.mubr.f32.gmra.mrb[0].mxu0 %v37
  %v105 = vpop.f32.mrb[0].mxu0
  %v106 = vadd.f32 %v28, %v105
  %v107 = vpop.f32.mrb[0].mxu0
  %v108 = vadd.f32 %v32, %v107
  %109 = vdwg.mxu0
  %110 = vst [vmem:[%s3] sm:$0xff] %v106
  %111 = vst [vmem:[%s3 + $0x8] sm:$0xff] %v108
  // Predicated region
  $region14: #{dst_pretraining_heads_forward.3} parent=0 // pred_check
    _
  $region15: #{dst_pretraining_heads_forward.3} parent=0 // pred_check_branch
    %113 = sbr.rel (0) target = $region17
  $region16: #{dst_pretraining_heads_forward.3} parent=0 // pred_region
    _
  $region17: #{dst_pretraining_heads_forward.3} parent=0 // pred_fallthru
    _
  // Predicated region
  $region18: #{dst_pretraining_heads_forward.3} parent=0 // pred_check
    _
  $region19: #{dst_pretraining_heads_forward.3} parent=0 // pred_check_branch
    %115 = sbr.rel (0) target = $region21
  $region20: #{dst_pretraining_heads_forward.3} parent=0 // pred_region
    _
  $region21: #{dst_pretraining_heads_forward.3} parent=0 // pred_fallthru
    _

// kernel: dst_pretraining_heads_forward.2
$region0: #{dst_pretraining_heads_forward.2}
  #allocation0 [shape = 'u32[]', space=smem, size = 0x4, offset = 0x4, fixed_abs, tag = 'smem constant byte address 0x4 - core index']
  #allocation1 [shape = 'u32[144,128]{1,0:T(1,128)}', space=vmem, size = 0x12000, scoped, tag = 'internal scratch']
  #allocation2 [shape = 'bf16[16,32]{1,0:T(16,128)(2,1)}', space=vmem, size = 0x1000, scoped, tag = 'scratch operand']
  %s0 = inlined_call_operand.vmem [shape: f32[16,32], index: 0, kind: input, shape index: {}]
  %s1 = inlined_call_operand.vmem [shape: bf16[32,32], index: 1, kind: input, shape index: {}]
  %s2 = inlined_call_operand.vmem [shape: f32[1,32], index: 2, kind: input, shape index: {}]
  %s3 = inlined_call_operand.vmem [shape: f32[1,32], index: 3, kind: input, shape index: {}]
  %s4 = inlined_call_operand.vmem [shape: f32[1,32], index: 4, kind: input, shape index: {}]
  %s5 = inlined_call_operand.vmem [shape: bf16[32,128], index: 5, kind: input, shape index: {}]
  %s6 = inlined_call_operand.vmem [shape: f32[1,128], index: 6, kind: input, shape index: {}]
  %s7 = inlined_call_operand.vmem [shape: bf16[16,128], index: 7, kind: output, shape index: {}]
  %s8 = sld [smem:[#allocation0]]
  $region42: #{dst_pretraining_heads_forward.2} parent=0
    _
  %s10 = ssub.s32 1, %s8
  %s11 = scalar_select 0, %s10, %s8
  // Predicated region
  $region2: #{dst_pretraining_heads_forward.2} parent=0 // pred_check
    _
  $region3: #{dst_pretraining_heads_forward.2} parent=0 // pred_check_branch
    %13 = sbr.rel (0) target = $region5
  $region4: #{dst_pretraining_heads_forward.2} parent=0 // pred_region
    _
  $region5: #{dst_pretraining_heads_forward.2} parent=0 // pred_fallthru
    _
  // Predicated region
  $region6: #{dst_pretraining_heads_forward.2} parent=0 // pred_check
    _
  $region7: #{dst_pretraining_heads_forward.2} parent=0 // pred_check_branch
    %15 = sbr.rel (0) target = $region9
  $region8: #{dst_pretraining_heads_forward.2} parent=0 // pred_region
    _
  $region9: #{dst_pretraining_heads_forward.2} parent=0 // pred_fallthru
    _
  // Predicated region
  $region10: #{dst_pretraining_heads_forward.2} parent=0 // pred_check
    _
  $region11: #{dst_pretraining_heads_forward.2} parent=0 // pred_check_branch
    %17 = sbr.rel (0) target = $region13
  $region12: #{dst_pretraining_heads_forward.2} parent=0 // pred_region
    _
  $region13: #{dst_pretraining_heads_forward.2} parent=0 // pred_fallthru
    _
  // Predicated region
  $region14: #{dst_pretraining_heads_forward.2} parent=0 // pred_check
    _
  $region15: #{dst_pretraining_heads_forward.2} parent=0 // pred_check_branch
    %19 = sbr.rel (0) target = $region17
  $region16: #{dst_pretraining_heads_forward.2} parent=0 // pred_region
    _
  $region17: #{dst_pretraining_heads_forward.2} parent=0 // pred_fallthru
    _
  // Predicated region
  $region18: #{dst_pretraining_heads_forward.2} parent=0 // pred_check
    _
  $region19: #{dst_pretraining_heads_forward.2} parent=0 // pred_check_branch
    %21 = sbr.rel (0) target = $region21
  $region20: #{dst_pretraining_heads_forward.2} parent=0 // pred_region
    _
  $region21: #{dst_pretraining_heads_forward.2} parent=0 // pred_fallthru
    _
  // Predicated region
  $region22: #{dst_pretraining_heads_forward.2} parent=0 // pred_check
    _
  $region23: #{dst_pretraining_heads_forward.2} parent=0 // pred_check_branch
    %23 = sbr.rel (0) target = $region25
  $region24: #{dst_pretraining_heads_forward.2} parent=0 // pred_region
    _
  $region25: #{dst_pretraining_heads_forward.2} parent=0 // pred_fallthru
    _
  // Predicated region
  $region26: #{dst_pretraining_heads_forward.2} parent=0 // pred_check
    _
  $region27: #{dst_pretraining_heads_forward.2} parent=0 // pred_check_branch
    %25 = sbr.rel (0) target = $region29
  $region28: #{dst_pretraining_heads_forward.2} parent=0 // pred_region
    _
  $region29: #{dst_pretraining_heads_forward.2} parent=0 // pred_fallthru
    _
  %p27 = scmp.eq.s32.totalorder 0, 0
  // Predicated region
  $region30: #{dst_pretraining_heads_forward.2} parent=0 // pred_check
    %p28 = pneg %p27
  $region31: #{dst_pretraining_heads_forward.2} parent=0 // pred_check_branch
    %30 = sbr.rel (%p28) target = $region33
  $region32: #{dst_pretraining_heads_forward.2} parent=0 // pred_region
    %v31 = vld [vmem:[%s0] sm:$0xff]
    %v32 = vld [vmem:[%s0 + $0x8] sm:$0xff]
    %v33 = vpack.c.bf16 %v32, %v31
    %v34 = vld [vmem:[%s1] sm:$0xf]
    %v35 = vld [vmem:[%s1 + $0x4] sm:$0xf]
    %v36 = vld [vmem:[%s1 + $0x8] sm:$0xf]
    %v37 = vld [vmem:[%s1 + $0xc] sm:$0xf]
    %v38 = vld [vmem:[%s2] sm:$0x1]
    %v40 = vlaneseq
    %v41 = vshrl.u32 %v40, 7
    %v42 = vsub.s32 0, %v41
    %v43 = vrot.slane %v38, %v42
    %v49 = vunpack.c.l.b16 %v34
    %v50 = vunpack.c.l.b16 %v35
    %v51 = vunpack.c.l.b16 %v36
    %v52 = vunpack.c.l.b16 %v37
    %v53 = vpack.c.b16 %v50, %v49
    %v54 = vpack.c.b16 %v52, %v51
    %vm57 = vcmask 261120
    %v59 = vsel %vm57, %v33, 0
    %61 = vmatprep.subr.bf16.mxu0 0
    %62 = vmatpush1.bf16.msra.mxu0 %v53
    %63 = vmatprep.subr.bf16.mxu0 0
    %64 = vmatpush1.bf16.msra.mxu0 %v54
    %65 = vmatprep.subr.bf16.mxu0 0
    %66 = vmatpush1.bf16.msra.mxu0 0
    %67 = vmatprep.subr.bf16.mxu0 0
    %68 = vmatpush1.bf16.msra.mxu0 0
    %69 = vmatprep.subr.bf16.mxu0 0
    %70 = vmatpush1.bf16.msra.mxu0 0
    %71 = vmatprep.subr.bf16.mxu0 0
    %72 = vmatpush1.bf16.msra.mxu0 0
    %73 = vmatprep.subr.bf16.mxu0 0
    %74 = vmatpush1.bf16.msra.mxu0 0
    %75 = vmatprep.subr.bf16.mxu0 0
    %76 = vmatpush1.bf16.msra.mxu0 0
    %77 = vmatprep.subr.bf16.mxu0 0
    %78 = vmatpush1.bf16.msra.mxu0 0
    %79 = vmatprep.subr.bf16.mxu0 0
    %80 = vmatpush1.bf16.msra.mxu0 0
    %81 = vmatprep.subr.bf16.mxu0 0
    %82 = vmatpush1.bf16.msra.mxu0 0
    %83 = vmatprep.subr.bf16.mxu0 0
    %84 = vmatpush1.bf16.msra.mxu0 0
    %85 = vmatprep.subr.bf16.mxu0 0
    %86 = vmatpush1.bf16.msra.mxu0 0
    %87 = vmatprep.subr.bf16.mxu0 0
    %88 = vmatpush1.bf16.msra.mxu0 0
    %89 = vmatprep.subr.bf16.mxu0 0
    %90 = vmatpush1.bf16.msra.mxu0 0
    %91 = vmatprep.subr.bf16.mxu0 0
    %92 = vmatpush1.bf16.msra.mxu0 0
    %93 = vmatprep.mubr.bf16.mxu0 0
    %94 = vmatmul.mubr.bf16.gmra.mrb[0].mxu0 %v59
    %v95 = vpop.f32.mrb[0].mxu0
    %v96 = vadd.f32 %v43, %v95
    %v97 = vpop.f32.mrb[0].mxu0
    %v98 = vpop.f32.mrb[0].mxu0
    %v99 = vadd.f32 %v43, %v98
    %v100 = vpop.f32.mrb[0].mxu0
    %101 = vdwg.mxu0
    %v102 = vmul.f32 %v96, 0.5
    %v103 = vmul.f32 %v99, 0.5
    %v104 = vmul.f32 %v96, 0.70710677
    %v105 = vmul.f32 %v99, 0.70710677
    %v106 = verf.f32.pop %v104
    %v107 = verf.f32.pop %v105
    %v108 = vadd.f32 %v106, 1.0
    %v109 = vadd.f32 %v107, 1.0
    %v110 = vmul.f32 %v102, %v108
    %v111 = vmul.f32 %v103, %v109
    %v112 = vsel %vm57, %v110, 0.0
    %113 = vadd.xlane.f32.xlu0 %v112
    %v114 = vpop.xlane.xlu0 %113
    %v115 = vsel %vm57, %v111, 0.0
    %116 = vadd.xlane.f32.xlu0 %v115
    %v117 = vpop.xlane.xlu0 %116
    %v118 = vrcp.pop 32.0
    %v119 = vmul.f32 %v114, %v118
    %v120 = vmul.f32 %v117, %v118
    %v121 = vsub.f32 %v110, %v119
    %v122 = vsub.f32 %v111, %v120
    %v123 = vmul.f32 %v121, %v121
    %v124 = vmul.f32 %v122, %v122
    %v125 = vsel %vm57, %v123, 0.0
    %126 = vadd.xlane.f32.xlu0 %v125
    %v127 = vpop.xlane.xlu0 %126
    %v128 = vsel %vm57, %v124, 0.0
    %129 = vadd.xlane.f32.xlu0 %v128
    %v130 = vpop.xlane.xlu0 %129
    %v131 = vmul.f32 %v127, %v118
    %v132 = vmul.f32 %v130, %v118
    %v133 = vadd.f32 %v131, 1e-12
    %v134 = vadd.f32 %v132, 1e-12
    %v135 = vrsqrt.pop %v133
    %v136 = vrsqrt.pop %v134
    %v137 = vmul.f32 %v121, %v135
    %v138 = vmul.f32 %v122, %v136
    %v139 = vld [vmem:[%s3] sm:$0x1]
    %v141 = vlaneseq
    %v142 = vshrl.u32 %v141, 7
    %v143 = vsub.s32 0, %v142
    %v144 = vrot.slane %v139, %v143
    %v146 = vmul.f32 %v137, %v144
    %v147 = vmul.f32 %v138, %v144
    %v148 = vld [vmem:[%s4] sm:$0x1]
    %v150 = vlaneseq
    %v151 = vshrl.u32 %v150, 7
    %v152 = vsub.s32 0, %v151
    %v153 = vrot.slane %v148, %v152
    %v155 = vadd.f32 %v146, %v153
    %v156 = vadd.f32 %v147, %v153
    %v157 = vpack.c.bf16 %v156, %v155
    %158 = vst.msk [vmem:[#allocation2] sm:$0xff] %vm57, %v157
  $region33: #{dst_pretraining_heads_forward.2} parent=0 // pred_fallthru
    _
  %v159 = vld [vmem:[#allocation2] sm:$0xff]
  %v160 = vld [vmem:[%s5] sm:$0xf]
  %v161 = vld [vmem:[%s5 + $0x4] sm:$0xf]
  %v162 = vld [vmem:[%s5 + $0x8] sm:$0xf]
  %v163 = vld [vmem:[%s5 + $0xc] sm:$0xf]
  %v164 = vld [vmem:[%s6] sm:$0x1]
  %v166 = vlaneseq
  %v167 = vshrl.u32 %v166, 7
  %v168 = vsub.s32 0, %v167
  %v169 = vrot.slane %v164, %v168
  %v175 = vunpack.c.l.b16 %v160
  %v176 = vunpack.c.l.b16 %v161
  %v177 = vunpack.c.l.b16 %v162
  %v178 = vunpack.c.l.b16 %v163
  %v179 = vpack.c.b16 %v176, %v175
  %v180 = vpack.c.b16 %v178, %v177
  %vm183 = vcmask 261120
  %v185 = vsel %vm183, %v159, 0
  %187 = vmatprep.subr.bf16.mxu0 0
  %188 = vmatpush1.bf16.msra.mxu0 %v179
  %189 = vmatprep.subr.bf16.mxu0 0
  %190 = vmatpush1.bf16.msra.mxu0 %v180
  %191 = vmatprep.subr.bf16.mxu0 0
  %192 = vmatpush1.bf16.msra.mxu0 0
  %193 = vmatprep.subr.bf16.mxu0 0
  %194 = vmatpush1.bf16.msra.mxu0 0
  %195 = vmatprep.subr.bf16.mxu0 0
  %196 = vmatpush1.bf16.msra.mxu0 0
  %197 = vmatprep.subr.bf16.mxu0 0
  %198 = vmatpush1.bf16.msra.mxu0 0
  %199 = vmatprep.subr.bf16.mxu0 0
  %200 = vmatpush1.bf16.msra.mxu0 0
  %201 = vmatprep.subr.bf16.mxu0 0
  %202 = vmatpush1.bf16.msra.mxu0 0
  %203 = vmatprep.subr.bf16.mxu0 0
  %204 = vmatpush1.bf16.msra.mxu0 0
  %205 = vmatprep.subr.bf16.mxu0 0
  %206 = vmatpush1.bf16.msra.mxu0 0
  %207 = vmatprep.subr.bf16.mxu0 0
  %208 = vmatpush1.bf16.msra.mxu0 0
  %209 = vmatprep.subr.bf16.mxu0 0
  %210 = vmatpush1.bf16.msra.mxu0 0
  %211 = vmatprep.subr.bf16.mxu0 0
  %212 = vmatpush1.bf16.msra.mxu0 0
  %213 = vmatprep.subr.bf16.mxu0 0
  %214 = vmatpush1.bf16.msra.mxu0 0
  %215 = vmatprep.subr.bf16.mxu0 0
  %216 = vmatpush1.bf16.msra.mxu0 0
  %217 = vmatprep.subr.bf16.mxu0 0
  %218 = vmatpush1.bf16.msra.mxu0 0
  %219 = vmatprep.mubr.bf16.mxu0 0
  %220 = vmatmul.mubr.bf16.gmra.mrb[0].mxu0 %v185
  %v221 = vpop.f32.mrb[0].mxu0
  %v222 = vadd.f32 %v169, %v221
  %v223 = vpop.f32.mrb[0].mxu0
  %v224 = vpop.f32.mrb[0].mxu0
  %v225 = vadd.f32 %v169, %v224
  %v226 = vpop.f32.mrb[0].mxu0
  %227 = vdwg.mxu0
  %v228 = vpack.c.bf16 %v225, %v222
  %v230 = vunpack.c.l.b16 %v228
  %v231 = vunpack.c.h.b16 %v228
  %v232 = vpack.c.b16 %v230, %v230
  %v233 = vpack.c.b16 %v231, %v231
  %236 = vst [vmem:[%s7] sm:$0xf] %v232
  %237 = vst [vmem:[%s7 + $0x4] sm:$0xf] %v233
  // Predicated region
  $region34: #{dst_pretraining_heads_forward.2} parent=0 // pred_check
    _
  $region35: #{dst_pretraining_heads_forward.2} parent=0 // pred_check_branch
    %239 = sbr.rel (0) target = $region37
  $region36: #{dst_pretraining_heads_forward.2} parent=0 // pred_region
    _
  $region37: #{dst_pretraining_heads_forward.2} parent=0 // pred_fallthru
    _
  // Predicated region
  $region38: #{dst_pretraining_heads_forward.2} parent=0 // pred_check
    _
  $region39: #{dst_pretraining_heads_forward.2} parent=0 // pred_check_branch
    %241 = sbr.rel (0) target = $region41
  $region40: #{dst_pretraining_heads_forward.2} parent=0 // pred_region
    _
  $region41: #{dst_pretraining_heads_forward.2} parent=0 // pred_fallthru
    _

</llo_original>
